<compile_context>
chip_gen: v7x
topology: tpu7x:2x2x1
jax: 0.10.0
libtpu: 0.0.40
codegen_flags: <defaults>
</compile_context>

<pallas_src>
import numpy as np
import jax
import jax.numpy as jnp
from jax.experimental import pallas as pl
from jax.experimental.pallas import tpu as pltpu

KSIZE = 5
SIGMA = 1.0


# --------------------------------------------------------------------------
# Operator construction (host-side numpy, same math as
# PyramidLayer._create_gaussian_kernel).
# --------------------------------------------------------------------------
def _gaussian_1d(kernel_size=KSIZE, sigma=SIGMA):
    x = np.arange(kernel_size, dtype=np.float64) - (kernel_size - 1) / 2.0
    k = np.exp(-x ** 2 / (2.0 * sigma ** 2))
    return k / k.sum()


def _level_operators(h, w):
    """Return R (h//2, h) and C (w, w//2) with  R @ x @ C == avgpool2(blur5(x))."""
    k1 = _gaussian_1d()
    pad = (KSIZE - 1) // 2

    def banded(n):
        b = np.zeros((n, n), dtype=np.float64)
        for i in range(n):
            for t in range(KSIZE):
                j = i + t - pad
                if 0 <= j < n:          # zero padding of the conv
                    b[i, j] = k1[t]
        return b

    def pool(n):
        p = np.zeros((n // 2, n), dtype=np.float64)
        rows = np.arange(n // 2)
        p[rows, 2 * rows] = 0.5
        p[rows, 2 * rows + 1] = 0.5
        return p

    r = pool(h) @ banded(h)              # (h//2, h)
    c = banded(w).T @ pool(w).T          # (w, w//2)
    return r.astype(np.float32), c.astype(np.float32)


# --------------------------------------------------------------------------
# Hardware-aware sizing helpers.
# --------------------------------------------------------------------------
def _vmem_capacity_bytes():
    try:
        return int(pltpu.get_tpu_info().vmem_capacity_bytes)
    except Exception:
        return 64 * 1024 * 1024        # v7x per-TensorCore value: safe lower bound


def _num_tensorcores():
    """1 for single-TC generations (v5e/v6e), else assume 2 (v7x/v5p/...)."""
    try:
        kind = jax.devices()[0].device_kind.lower()
    except Exception:
        return 2
    one_tc_tags = ("v5e", "v5 lite", "v5lite", "v6e", "v6 lite", "v6lite")
    return 1 if any(t in kind for t in one_tc_tags) else 2


def _per_plane_step_bytes(h, w, levels, x_itemsize, c_itemsize):
    """Per-plane VMEM bytes for one grid step (dbuf I/O blocks + temporaries)."""
    b = 2 * h * w * x_itemsize                      # input block, double-buffered
    hh, ww = h, w
    for _ in range(levels - 1):
        ho, wo = hh // 2, ww // 2
        b += 2 * ho * wo * x_itemsize               # output block, double-buffered
        # conservative in-kernel temporaries for this level:
        b += hh * ww * c_itemsize                   # cast of level input
        b += hh * wo * 4                            # column-pass result in f32
        b += hh * wo * c_itemsize                   # its cast for the row pass
        b += ho * hh * c_itemsize                   # per-plane share of broadcast R
        b += ho * wo * 4                            # row-pass accumulator in f32
        hh, ww = ho, wo
    return b


def _op_bytes(h, w, levels, c_itemsize):
    """Total bytes of R/C operators, double-buffered by the pipeline."""
    b = 0
    hh, ww = h, w
    for _ in range(levels - 1):
        b += (hh // 2) * hh * c_itemsize            # R
        b += ww * (ww // 2) * c_itemsize            # C
        hh, ww = hh // 2, ww // 2
    return 2 * b


def _choose_plane_block(n_planes, per_plane_bytes, fixed_bytes, budget, num_tc):
    divisors = [d for d in range(1, n_planes + 1) if n_planes % d == 0]
    fitting = [d for d in divisors if fixed_bytes + d * per_plane_bytes <= budget]
    if not fitting:
        return 1        # TODO(synk): spatial tiling fallback instead of hoping P=1 fits
    if num_tc >= 2:
        # Both TensorCores get balanced, pipelineable work: even number of >=4 steps.
        good = [d for d in fitting
                if (n_planes // d) >= 4 and (n_planes // d) % 2 == 0]
        if good:
            return max(good)
        ok = [d for d in fitting if (n_planes // d) >= 2]
        if ok:
            return max(ok)
    # Single-TC (or tiny problems): biggest resident block, single step is fine.
    return max(fitting)


# --------------------------------------------------------------------------
# Fused multi-level pyramid kernel.
# --------------------------------------------------------------------------
def _make_pyramid_kernel(num_down, plane_blk, cdtype, level_shapes):
    """Kernel refs: (x, R1, C1, ..., R_L, C_L, out1, ..., out_L)."""

    def kernel(*refs):
        x_ref = refs[0]
        op_refs = refs[1:1 + 2 * num_down]
        out_refs = refs[1 + 2 * num_down:]

        cur = x_ref                                   # VMEM-resident input block
        for lvl in range(num_down):
            r = op_refs[2 * lvl][...]                 # (h_out, h_in), compute dtype
            c = op_refs[2 * lvl + 1][...]             # (w_in,  w_out), compute dtype
            o_ref = out_refs[lvl]
            h_in, w_in = level_shapes[lvl]
            h_out, w_out = h_in // 2, w_in // 2

            x_l = cur[...].astype(cdtype)             # (P, h_in, w_in)
            # R is broadcast once per level (hoisted, not per plane) so the row
            # pass is a single batched MXU contraction.
            r_b = jnp.broadcast_to(r[None, :, :], (plane_blk, h_out, h_in))

            if w_in > h_in:
                # Row pass first: contract the larger spatial dim first.
                y = jnp.einsum('poh,phw->pow', r_b, x_l,
                               preferred_element_type=jnp.float32)       # (P,h_out,w_in)
                y = y.astype(cdtype)
                z = jnp.dot(y.reshape(plane_blk * h_out, w_in), c,
                            preferred_element_type=jnp.float32)          # (P*h_out,w_out)
                out = z.reshape(plane_blk, h_out, w_out)
            else:
                # Column pass first: one merged 2-D MXU matmul over every plane.
                z = jnp.dot(x_l.reshape(plane_blk * h_in, w_in), c,
                            preferred_element_type=jnp.float32)          # (P*h_in,w_out)
                z = z.reshape(plane_blk, h_in, w_out).astype(cdtype)
                # Row pass: one batched contraction + one dense full-block store.
                out = jnp.einsum('poh,phw->pow', r_b, z,
                                 preferred_element_type=jnp.float32)     # (P,h_out,w_out)

            o_ref[...] = out.astype(o_ref.dtype)
            cur = o_ref                               # fused next level, no HBM trip
        return

    return kernel


# --------------------------------------------------------------------------
# Wrapper.
# --------------------------------------------------------------------------
def pyramid_layer(x, levels=3, compute_dtype=None):
    """Pallas-backed equivalent of PyramidLayer.forward: returns a list."""
    x = jnp.asarray(x)
    if levels <= 1:
        return [x]

    n, ch, h, w = x.shape
    factor = 1 << (levels - 1)
    assert h % factor == 0 and w % factor == 0, (
        "pyramid_layer requires H, W divisible by 2**(levels-1)")

    if compute_dtype is None:
        # bf16 MXU operands (f32 accumulation) once the dense-banded matmuls
        # become compute-bound; keep full f32 accuracy for small planes.
        compute_dtype = jnp.bfloat16 if (h * w >= 256 * 256) else jnp.float32
    compute_dtype = jnp.dtype(compute_dtype)

    n_planes = n * ch
    x_planes = x.reshape(n_planes, h, w)

    x_isz = jnp.dtype(x.dtype).itemsize
    c_isz = compute_dtype.itemsize

    # Generation-aware VMEM budgeting.
    vmem_cap = _vmem_capacity_bytes()
    vmem_limit = int(min(0.85 * vmem_cap, 100 * 1024 * 1024))
    budget = int(0.8 * vmem_limit)

    per_plane = _per_plane_step_bytes(h, w, levels, x_isz, c_isz)
    fixed = _op_bytes(h, w, levels, c_isz)
    min_need = int(1.25 * (fixed + per_plane))
    if min_need > budget:
        # Even a single plane is tight: give the compiler everything we safely can.
        vmem_limit = int(min(0.95 * vmem_cap, max(vmem_limit, min_need)))
        budget = int(0.9 * vmem_limit)

    num_tc = _num_tensorcores()
    plane_blk = _choose_plane_block(n_planes, per_plane, fixed, budget, num_tc)
    grid = (n_planes // plane_blk,)

    # Per-level operators, passed as (small) constant inputs in the compute dtype.
    ops = []
    level_shapes = []
    for l in range(levels - 1):
        hl, wl = h >> l, w >> l
        level_shapes.append((hl, wl))
        r_np, c_np = _level_operators(hl, wl)
        ops.append(jnp.asarray(r_np, dtype=compute_dtype))
        ops.append(jnp.asarray(c_np, dtype=compute_dtype))

    in_specs = [pl.BlockSpec((plane_blk, h, w), lambda i: (i, 0, 0))]
    for op in ops:
        in_specs.append(pl.BlockSpec(op.shape, lambda i: (0, 0)))

    out_shapes = []
    out_specs = []
    for l in range(1, levels):
        hl, wl = h >> l, w >> l
        out_shapes.append(jax.ShapeDtypeStruct((n_planes, hl, wl), x.dtype))
        out_specs.append(pl.BlockSpec((plane_blk, hl, wl), lambda i: (i, 0, 0)))

    kernel = _make_pyramid_kernel(levels - 1, plane_blk, compute_dtype, level_shapes)

    outs = pl.pallas_call(
        kernel,
        out_shape=tuple(out_shapes),
        grid=grid,
        in_specs=in_specs,
        out_specs=tuple(out_specs),
        compiler_params=pltpu.CompilerParams(
            dimension_semantics=("parallel",),
            vmem_limit_bytes=vmem_limit),
    )(x_planes, *ops)

    pyramid = [x]
    for l, o in zip(range(1, levels), outs):
        pyramid.append(o.reshape(n, ch, h >> l, w >> l))
    return pyramid


# ------------------ pure-JAX reference (for self-check) ------------------
def _ref_blur_downsample(x):
    pad = (KSIZE - 1) // 2
    k1 = _gaussian_1d()
    k2 = jnp.asarray(np.outer(k1, k1).astype(np.float32))
    N, C, H, W = x.shape
    xp = jnp.pad(x, ((0, 0), (0, 0), (pad, pad), (pad, pad)))
    blurred = jnp.zeros_like(x)
    for di in range(KSIZE):
        for dj in range(KSIZE):
            blurred = blurred + k2[di, dj] * xp[:, :, di:di + H, dj:dj + W]
    return 0.25 * (blurred[:, :, 0::2, 0::2] + blurred[:, :, 0::2, 1::2]
                   + blurred[:, :, 1::2, 0::2] + blurred[:, :, 1::2, 1::2])


def _ref_pyramid(x, levels=3):
    pyramid = [x]
    current = x
    for _ in range(levels - 1):
        current = _ref_blur_downsample(current)
        pyramid.append(current)
    return pyramid


if __name__ == "__main__":
    key = jax.random.PRNGKey(0)
    x = jax.random.normal(key, (2, 4, 16, 16), dtype=jnp.float32)

    ref = _ref_pyramid(x, levels=3)
    expected_shapes = [(2, 4, 16, 16), (2, 4, 8, 8), (2, 4, 4, 4)]

    # Default path (f32 compute for small planes).
    pyr = pyramid_layer(x, levels=3)
    pyr = [jax.block_until_ready(p) for p in pyr]
    assert len(pyr) == 3
    for p, r, s in zip(pyr, ref, expected_shapes):
        assert p.shape == s, (p.shape, s)
        np.testing.assert_allclose(np.asarray(p), np.asarray(r),
                                   rtol=5e-3, atol=5e-3)

    # Exercise the bf16-MXU path (auto-selected for large planes) with a
    # correspondingly looser tolerance.
    pyr_bf16 = pyramid_layer(x, levels=3, compute_dtype=jnp.bfloat16)
    pyr_bf16 = [jax.block_until_ready(p) for p in pyr_bf16]
    for p, r, s in zip(pyr_bf16, ref, expected_shapes):
        assert p.shape == s, (p.shape, s)
        np.testing.assert_allclose(np.asarray(p), np.asarray(r),
                                   rtol=5e-2, atol=5e-2)

    print("KERNEL_OK")
</pallas_src>

<mosaic_0001>
module attributes {stable_mosaic.version = 11 : i64} {
  func.func @kernel(%arg0: i32, %arg1: memref<2x16x16xf32, #tpu.memory_space<vmem>>, %arg2: memref<8x16xf32, #tpu.memory_space<vmem>>, %arg3: memref<16x8xf32, #tpu.memory_space<vmem>>, %arg4: memref<4x8xf32, #tpu.memory_space<vmem>>, %arg5: memref<8x4xf32, #tpu.memory_space<vmem>>, %arg6: memref<2x8x8xf32, #tpu.memory_space<vmem>>, %arg7: memref<2x4x4xf32, #tpu.memory_space<vmem>>) attributes {dimension_semantics = [#tpu.dimension_semantics<parallel>], iteration_bounds = array<i64: 4>, scalar_prefetch = 0 : i64, scratch_operands = 0 : i64, tpu.core_type = #tpu.core_type<tc>, window_params = [{transform_indices = @transform_0, window_bounds = array<i64: 2, 16, 16>}, {pipeline_mode = #tpu.pipeline_mode<synchronous>, transform_indices = @transform_1, window_bounds = array<i64: 8, 16>}, {pipeline_mode = #tpu.pipeline_mode<synchronous>, transform_indices = @transform_2, window_bounds = array<i64: 16, 8>}, {pipeline_mode = #tpu.pipeline_mode<synchronous>, transform_indices = @transform_3, window_bounds = array<i64: 4, 8>}, {pipeline_mode = #tpu.pipeline_mode<synchronous>, transform_indices = @transform_4, window_bounds = array<i64: 8, 4>}, {transform_indices = @transform_5, window_bounds = array<i64: 2, 8, 8>}, {transform_indices = @transform_6, window_bounds = array<i64: 2, 4, 4>}]} {
    %c0 = arith.constant 0 : index
    %c0_0 = arith.constant 0 : index
    %0 = vector.load %arg2[%c0, %c0_0] : memref<8x16xf32, #tpu.memory_space<vmem>>, vector<8x16xf32>
    %c0_1 = arith.constant 0 : index
    %c0_2 = arith.constant 0 : index
    %1 = vector.load %arg3[%c0_1, %c0_2] : memref<16x8xf32, #tpu.memory_space<vmem>>, vector<16x8xf32>
    %c0_3 = arith.constant 0 : index
    %c0_4 = arith.constant 0 : index
    %c0_5 = arith.constant 0 : index
    %2 = vector.load %arg1[%c0_3, %c0_4, %c0_5] : memref<2x16x16xf32, #tpu.memory_space<vmem>>, vector<2x16x16xf32>
    %3 = vector.shape_cast %0 : vector<8x16xf32> to vector<1x8x16xf32>
    %4 = vector.shape_cast %3 : vector<1x8x16xf32> to vector<1x8x16xf32>
    %5 = vector.broadcast %4 : vector<1x8x16xf32> to vector<2x8x16xf32>
    %6 = vector.shape_cast %2 : vector<2x16x16xf32> to vector<32x16xf32>
    %cst = arith.constant dense<0.000000e+00> : vector<32x8xf32>
    %7 = tpu.matmul %6, %1, %cst {dimension_numbers = #tpu.dot_dimension_numbers<[1], [0], [0], [1], [0, 0, 1, 1], [], []>} : vector<32x16xf32>, vector<16x8xf32>, vector<32x8xf32> -> vector<32x8xf32>
    %8 = vector.shape_cast %7 : vector<32x8xf32> to vector<2x16x8xf32>
    "tpu.trace_start"() <{level = 10 : i32, message = "poh,phw->pow"}> : () -> ()
    %cst_6 = arith.constant dense<0.000000e+00> : vector<2x8x8xf32>
    %9 = tpu.matmul %5, %8, %cst_6 {dimension_numbers = #tpu.dot_dimension_numbers<[2], [1], [1], [2], [0, 0, 0, 1, 1, 2], [0], [0]>} : vector<2x8x16xf32>, vector<2x16x8xf32>, vector<2x8x8xf32> -> vector<2x8x8xf32>
    "tpu.trace_stop"() : () -> ()
    %c0_7 = arith.constant 0 : index
    %c0_8 = arith.constant 0 : index
    %c0_9 = arith.constant 0 : index
    %10 = vector.load %arg6[%c0_7, %c0_8, %c0_9] : memref<2x8x8xf32, #tpu.memory_space<vmem>>, vector<2x8x8xf32>
    tpu.vector_store %arg6[%c0_7, %c0_8, %c0_9], %9 {strides = array<i32>} : memref<2x8x8xf32, #tpu.memory_space<vmem>>, vector<2x8x8xf32>,
    %c0_10 = arith.constant 0 : index
    %c0_11 = arith.constant 0 : index
    %11 = vector.load %arg4[%c0_10, %c0_11] : memref<4x8xf32, #tpu.memory_space<vmem>>, vector<4x8xf32>
    %c0_12 = arith.constant 0 : index
    %c0_13 = arith.constant 0 : index
    %12 = vector.load %arg5[%c0_12, %c0_13] : memref<8x4xf32, #tpu.memory_space<vmem>>, vector<8x4xf32>
    %c0_14 = arith.constant 0 : index
    %c0_15 = arith.constant 0 : index
    %c0_16 = arith.constant 0 : index
    %13 = vector.load %arg6[%c0_14, %c0_15, %c0_16] : memref<2x8x8xf32, #tpu.memory_space<vmem>>, vector<2x8x8xf32>
    %14 = vector.shape_cast %11 : vector<4x8xf32> to vector<1x4x8xf32>
    %15 = vector.shape_cast %14 : vector<1x4x8xf32> to vector<1x4x8xf32>
    %16 = vector.broadcast %15 : vector<1x4x8xf32> to vector<2x4x8xf32>
    %17 = vector.shape_cast %13 : vector<2x8x8xf32> to vector<16x8xf32>
    %cst_17 = arith.constant dense<0.000000e+00> : vector<16x4xf32>
    %18 = tpu.matmul %17, %12, %cst_17 {dimension_numbers = #tpu.dot_dimension_numbers<[1], [0], [0], [1], [0, 0, 1, 1], [], []>} : vector<16x8xf32>, vector<8x4xf32>, vector<16x4xf32> -> vector<16x4xf32>
    %19 = vector.shape_cast %18 : vector<16x4xf32> to vector<2x8x4xf32>
    "tpu.trace_start"() <{level = 10 : i32, message = "poh,phw->pow"}> : () -> ()
    %cst_18 = arith.constant dense<0.000000e+00> : vector<2x4x4xf32>
    %20 = tpu.matmul %16, %19, %cst_18 {dimension_numbers = #tpu.dot_dimension_numbers<[2], [1], [1], [2], [0, 0, 0, 1, 1, 2], [0], [0]>} : vector<2x4x8xf32>, vector<2x8x4xf32>, vector<2x4x4xf32> -> vector<2x4x4xf32>
    "tpu.trace_stop"() : () -> ()
    %c0_19 = arith.constant 0 : index
    %c0_20 = arith.constant 0 : index
    %c0_21 = arith.constant 0 : index
    %21 = vector.load %arg7[%c0_19, %c0_20, %c0_21] : memref<2x4x4xf32, #tpu.memory_space<vmem>>, vector<2x4x4xf32>
    tpu.vector_store %arg7[%c0_19, %c0_20, %c0_21], %20 {strides = array<i32>} : memref<2x4x4xf32, #tpu.memory_space<vmem>>, vector<2x4x4xf32>,
    return
  }
  func.func @transform_0(%arg0: i32) -> (i32, i32, i32) {
    %c0_i32 = arith.constant 0 : i32
    %c0_i32_0 = arith.constant 0 : i32
    %c0_i32_1 = arith.constant 0 : i32
    return %arg0, %c0_i32, %c0_i32_0 : i32, i32, i32
  }
  func.func @transform_1(%arg0: i32) -> (i32, i32) {
    %c0_i32 = arith.constant 0 : i32
    %c0_i32_0 = arith.constant 0 : i32
    %c0_i32_1 = arith.constant 0 : i32
    return %c0_i32, %c0_i32_0 : i32, i32
  }
  func.func @transform_2(%arg0: i32) -> (i32, i32) {
    %c0_i32 = arith.constant 0 : i32
    %c0_i32_0 = arith.constant 0 : i32
    %c0_i32_1 = arith.constant 0 : i32
    return %c0_i32, %c0_i32_0 : i32, i32
  }
  func.func @transform_3(%arg0: i32) -> (i32, i32) {
    %c0_i32 = arith.constant 0 : i32
    %c0_i32_0 = arith.constant 0 : i32
    %c0_i32_1 = arith.constant 0 : i32
    return %c0_i32, %c0_i32_0 : i32, i32
  }
  func.func @transform_4(%arg0: i32) -> (i32, i32) {
    %c0_i32 = arith.constant 0 : i32
    %c0_i32_0 = arith.constant 0 : i32
    %c0_i32_1 = arith.constant 0 : i32
    return %c0_i32, %c0_i32_0 : i32, i32
  }
  func.func @transform_5(%arg0: i32) -> (i32, i32, i32) {
    %c0_i32 = arith.constant 0 : i32
    %c0_i32_0 = arith.constant 0 : i32
    %c0_i32_1 = arith.constant 0 : i32
    return %arg0, %c0_i32, %c0_i32_0 : i32, i32, i32
  }
  func.func @transform_6(%arg0: i32) -> (i32, i32, i32) {
    %c0_i32 = arith.constant 0 : i32
    %c0_i32_0 = arith.constant 0 : i32
    %c0_i32_1 = arith.constant 0 : i32
    return %arg0, %c0_i32, %c0_i32_0 : i32, i32, i32
  }
}

</mosaic_0001>

<llo_original>
// kernel: tpu_custom_call.1
$region0: #{tpu_custom_call.1}
  #allocation0 [shape = 'u32[]', space=smem, size = 0x4, offset = 0x4, fixed_abs, tag = 'smem constant byte address 0x4 - core index']
  #allocation1 [shape = 'u32[144,128]{1,0:T(1,128)}', space=vmem, size = 0x12000, scoped, tag = 'internal scratch']
  %s0 = inlined_call_operand.hbm [shape: f32[8,16,16], index: 0, kind: input, shape index: {}]
  %s1 = inlined_call_operand.vmem [shape: f32[8,16], index: 1, kind: input, shape index: {}]
  %s2 = inlined_call_operand.vmem [shape: f32[16,8], index: 2, kind: input, shape index: {}]
  %s3 = inlined_call_operand.vmem [shape: f32[4,8], index: 3, kind: input, shape index: {}]
  %s4 = inlined_call_operand.vmem [shape: f32[8,4], index: 4, kind: input, shape index: {}]
  %s5 = inlined_call_operand.hbm [shape: f32[8,8,8], index: 5, kind: output, shape index: {0}]
  %s6 = inlined_call_operand.vmem [shape: f32[8,4,4], index: 6, kind: output, shape index: {1}]
  %7 = xla_tuple %s5, %s6
  %s8 = sld [smem:[#allocation0]]
  $region65: #{tpu_custom_call.1} parent=0
    _
  %s10 = ssub.s32 1, %s8
  %s11 = scalar_select 0, %s10, %s8
  $region1: #{tpu_custom_call.1} parent=0
    #allocation2 [shape = 'u8[32768]{0}', space=vmem, size = 0x8000, scoped, tag = 'input window, operand 0']
    #allocation3 [shape = 's32[2]{0}', space=sflag, size = 0x8, scoped, tag = 'scoped memory for tpu_custom_call.1']
    #allocation4 [shape = 's32[2]{0}', space=sflag, size = 0x8, scoped, tag = 'scoped memory for tpu_custom_call.1']
    #allocation5 [shape = 'u8[16384]{0}', space=vmem, size = 0x4000, scoped, tag = 'output window, operand 0']
    %12 = vsyncpa [#allocation3], 0
    %s13 = scalar_lea.sflag [#allocation3], 1
    %14 = vsyncpa %s13, 0
    %15 = vsyncpa [#allocation4], 0
    %s16 = scalar_lea.sflag [#allocation4], 1
    %17 = vsyncpa %s16, 0
    loop: start=0, step=1, limit=6
    $region2: #{tpu_custom_call.1} parent=1 // loop_pre_header
      _
    $region3: #{tpu_custom_call.1} parent=1 // loop_header
      %s19 = sphi 0, %s23
      %p20 = scmp.ge.s32.totalorder %s19, 6
      %s29 = sphi 0, %s31
      %s32 = sphi 0, %s29
      %s33 = sphi 0, %s32
      %s49 = sphi 0, %s33
      %s53 = sphi 0, %s53
      %s55 = sphi 0, %s53
      %s56 = sphi 0, %s55
      %s70 = sphi 0, %s56
      %s74 = sphi 0, %s74
      %s76 = sphi 0, %s74
      %s77 = sphi 0, %s76
      %s91 = sphi 0, %s77
      %s95 = sphi 0, %s95
      %s97 = sphi 0, %s95
      %s98 = sphi 0, %s97
      %s112 = sphi 0, %s98
      %s116 = sphi 0, %s116
      %s118 = sphi 0, %s116
      %s119 = sphi 0, %s118
      %s133 = sphi 0, %s119
      %s139 = sphi 0, %s141
      %s142 = sphi 0, %s139
      %s143 = sphi 0, %s142
      %s159 = sphi 0, %s143
      %s165 = sphi 0, %s167
      %s168 = sphi 0, %s165
      %s169 = sphi 0, %s168
      %s185 = sphi 0, %s169
    $region4: #{tpu_custom_call.1} parent=1 // loop_header_branch
      %22 = sbr.rel (%p20) target = $region8
    $region5: #{tpu_custom_call.1} parent=1 // loop_body
      %s24 = ssub.s32 %s19, 1
      %s25 = ssub.s32 %s19, 2
      %s26 = sadd.s32 %s19, 1
      %s27 = ssub.s32 %s19, %s26
      %p28 = scmp.eq.s32.totalorder %s27, 0
      %s30 = sadd.s32 %s29, 1
      %s31 = scalar_select %p28, %s29, %s30
      %p34 = pneg %p28
      %p35 = scmp.eq.s32.totalorder %s19, 3
      %p36 = por %p34, %p35
      %p37 = scmp.ne.s32.totalorder %s29, %s32
      %p38 = scmp.eq.s32.totalorder %s19, 0
      %p39 = por %p37, %p38
      %p40 = scmp.ne.s32.totalorder %s29, %s32
      %p41 = scmp.eq.s32.totalorder %s24, 3
      %p42 = por %p40, %p41
      %p43 = scmp.ne.s32.totalorder %s32, %s33
      %p44 = scmp.eq.s32.totalorder %s24, 0
      %p45 = por %p43, %p44
      %p46 = scmp.ne.s32.totalorder %s32, %s33
      %p47 = scmp.eq.s32.totalorder %s25, 3
      %p48 = por %p46, %p47
      %p50 = scmp.ne.s32.totalorder %s33, %s49
      %p51 = scmp.eq.s32.totalorder %s25, 0
      %p52 = por %p50, %p51
      %s54 = sadd.s32 %s53, 1
      %p57 = scmp.eq.s32.totalorder %s19, 3
      %p58 = scmp.ne.s32.totalorder %s53, %s55
      %p59 = scmp.eq.s32.totalorder %s19, 0
      %p60 = por %p58, %p59
      %p61 = scmp.ne.s32.totalorder %s53, %s55
      %p62 = scmp.eq.s32.totalorder %s24, 3
      %p63 = por %p61, %p62
      %p64 = scmp.ne.s32.totalorder %s55, %s56
      %p65 = scmp.eq.s32.totalorder %s24, 0
      %p66 = por %p64, %p65
      %p67 = scmp.ne.s32.totalorder %s55, %s56
      %p68 = scmp.eq.s32.totalorder %s25, 3
      %p69 = por %p67, %p68
      %p71 = scmp.ne.s32.totalorder %s56, %s70
      %p72 = scmp.eq.s32.totalorder %s25, 0
      %p73 = por %p71, %p72
      %s75 = sadd.s32 %s74, 1
      %p78 = scmp.eq.s32.totalorder %s19, 3
      %p79 = scmp.ne.s32.totalorder %s74, %s76
      %p80 = scmp.eq.s32.totalorder %s19, 0
      %p81 = por %p79, %p80
      %p82 = scmp.ne.s32.totalorder %s74, %s76
      %p83 = scmp.eq.s32.totalorder %s24, 3
      %p84 = por %p82, %p83
      %p85 = scmp.ne.s32.totalorder %s76, %s77
      %p86 = scmp.eq.s32.totalorder %s24, 0
      %p87 = por %p85, %p86
      %p88 = scmp.ne.s32.totalorder %s76, %s77
      %p89 = scmp.eq.s32.totalorder %s25, 3
      %p90 = por %p88, %p89
      %p92 = scmp.ne.s32.totalorder %s77, %s91
      %p93 = scmp.eq.s32.totalorder %s25, 0
      %p94 = por %p92, %p93
      %s96 = sadd.s32 %s95, 1
      %p99 = scmp.eq.s32.totalorder %s19, 3
      %p100 = scmp.ne.s32.totalorder %s95, %s97
      %p101 = scmp.eq.s32.totalorder %s19, 0
      %p102 = por %p100, %p101
      %p103 = scmp.ne.s32.totalorder %s95, %s97
      %p104 = scmp.eq.s32.totalorder %s24, 3
      %p105 = por %p103, %p104
      %p106 = scmp.ne.s32.totalorder %s97, %s98
      %p107 = scmp.eq.s32.totalorder %s24, 0
      %p108 = por %p106, %p107
      %p109 = scmp.ne.s32.totalorder %s97, %s98
      %p110 = scmp.eq.s32.totalorder %s25, 3
      %p111 = por %p109, %p110
      %p113 = scmp.ne.s32.totalorder %s98, %s112
      %p114 = scmp.eq.s32.totalorder %s25, 0
      %p115 = por %p113, %p114
      %s117 = sadd.s32 %s116, 1
      %p120 = scmp.eq.s32.totalorder %s19, 3
      %p121 = scmp.ne.s32.totalorder %s116, %s118
      %p122 = scmp.eq.s32.totalorder %s19, 0
      %p123 = por %p121, %p122
      %p124 = scmp.ne.s32.totalorder %s116, %s118
      %p125 = scmp.eq.s32.totalorder %s24, 3
      %p126 = por %p124, %p125
      %p127 = scmp.ne.s32.totalorder %s118, %s119
      %p128 = scmp.eq.s32.totalorder %s24, 0
      %p129 = por %p127, %p128
      %p130 = scmp.ne.s32.totalorder %s118, %s119
      %p131 = scmp.eq.s32.totalorder %s25, 3
      %p132 = por %p130, %p131
      %p134 = scmp.ne.s32.totalorder %s119, %s133
      %p135 = scmp.eq.s32.totalorder %s25, 0
      %p136 = por %p134, %p135
      %s137 = ssub.s32 %s19, %s26
      %p138 = scmp.eq.s32.totalorder %s137, 0
      %s140 = sadd.s32 %s139, 1
      %s141 = scalar_select %p138, %s139, %s140
      %p144 = pneg %p138
      %p145 = scmp.eq.s32.totalorder %s19, 3
      %p146 = por %p144, %p145
      %p147 = scmp.ne.s32.totalorder %s139, %s142
      %p148 = scmp.eq.s32.totalorder %s19, 0
      %p149 = por %p147, %p148
      %p150 = scmp.ne.s32.totalorder %s139, %s142
      %p151 = scmp.eq.s32.totalorder %s24, 3
      %p152 = por %p150, %p151
      %p153 = scmp.ne.s32.totalorder %s142, %s143
      %p154 = scmp.eq.s32.totalorder %s24, 0
      %p155 = por %p153, %p154
      %p156 = scmp.ne.s32.totalorder %s142, %s143
      %p157 = scmp.eq.s32.totalorder %s25, 3
      %p158 = por %p156, %p157
      %p160 = scmp.ne.s32.totalorder %s143, %s159
      %p161 = scmp.eq.s32.totalorder %s25, 0
      %p162 = por %p160, %p161
      %s163 = ssub.s32 %s19, %s26
      %p164 = scmp.eq.s32.totalorder %s163, 0
      %s166 = sadd.s32 %s165, 1
      %s167 = scalar_select %p164, %s165, %s166
      %p170 = pneg %p164
      %p171 = scmp.eq.s32.totalorder %s19, 3
      %p172 = por %p170, %p171
      %p173 = scmp.ne.s32.totalorder %s165, %s168
      %p174 = scmp.eq.s32.totalorder %s19, 0
      %p175 = por %p173, %p174
      %p176 = scmp.ne.s32.totalorder %s165, %s168
      %p177 = scmp.eq.s32.totalorder %s24, 3
      %p178 = por %p176, %p177
      %p179 = scmp.ne.s32.totalorder %s168, %s169
      %p180 = scmp.eq.s32.totalorder %s24, 0
      %p181 = por %p179, %p180
      %p182 = scmp.ne.s32.totalorder %s168, %s169
      %p183 = scmp.eq.s32.totalorder %s25, 3
      %p184 = por %p182, %p183
      %p186 = scmp.ne.s32.totalorder %s169, %s185
      %p187 = scmp.eq.s32.totalorder %s25, 0
      %p188 = por %p186, %p187
      %p189 = scmp.le.s32.totalorder 1, %s19
      %p190 = scmp.lt.s32.totalorder %s19, 5
      %p191 = pnand %p189, %p190
      %p192 = pneg %p191
      // Predicated region
      $region9: #{tpu_custom_call.1} parent=5 // pred_check
        _
      $region10: #{tpu_custom_call.1} parent=5 // pred_check_branch
        %194 = sbr.rel (%p191) target = $region12
      $region11: #{tpu_custom_call.1} parent=5 // pred_region
        %s195 = ssub.s32 %s19, 1
        // Predicated region
        $region13: #{tpu_custom_call.1} parent=11 // pred_check
          %p196 = pneg %p66
        $region14: #{tpu_custom_call.1} parent=11 // pred_check_branch
          %198 = sbr.rel (%p196) target = $region16
        $region15: #{tpu_custom_call.1} parent=11 // pred_region
          _
        $region16: #{tpu_custom_call.1} parent=11 // pred_fallthru
          _
        // Predicated region
        $region17: #{tpu_custom_call.1} parent=11 // pred_check
          %p199 = pneg %p87
        $region18: #{tpu_custom_call.1} parent=11 // pred_check_branch
          %201 = sbr.rel (%p199) target = $region20
        $region19: #{tpu_custom_call.1} parent=11 // pred_region
          _
        $region20: #{tpu_custom_call.1} parent=11 // pred_fallthru
          _
        // Predicated region
        $region21: #{tpu_custom_call.1} parent=11 // pred_check
          %p202 = pneg %p108
        $region22: #{tpu_custom_call.1} parent=11 // pred_check_branch
          %204 = sbr.rel (%p202) target = $region24
        $region23: #{tpu_custom_call.1} parent=11 // pred_region
          _
        $region24: #{tpu_custom_call.1} parent=11 // pred_fallthru
          _
        // Predicated region
        $region25: #{tpu_custom_call.1} parent=11 // pred_check
          %p205 = pneg %p129
        $region26: #{tpu_custom_call.1} parent=11 // pred_check_branch
          %207 = sbr.rel (%p205) target = $region28
        $region27: #{tpu_custom_call.1} parent=11 // pred_region
          _
        $region28: #{tpu_custom_call.1} parent=11 // pred_fallthru
          _
      $region12: #{tpu_custom_call.1} parent=5 // pred_fallthru
        _
      %p208 = scmp.lt.s32.totalorder %s19, 4
      // Predicated region
      $region29: #{tpu_custom_call.1} parent=5 // pred_check
        %p209 = pneg %p208
      $region30: #{tpu_custom_call.1} parent=5 // pred_check_branch
        %211 = sbr.rel (%p209) target = $region32
      $region31: #{tpu_custom_call.1} parent=5 // pred_region
        // Predicated region
        $region33: #{tpu_custom_call.1} parent=31 // pred_check
          %p212 = pneg %p39
        $region34: #{tpu_custom_call.1} parent=31 // pred_check_branch
          %214 = sbr.rel (%p212) target = $region36
        $region35: #{tpu_custom_call.1} parent=31 // pred_region
          %s215 = sand.u32 %s29, 1
          %s216 = scalar_lea.sflag [#allocation3], %s215
          %s217 = sand.u32 %s29, 1
          %s218 = smul.addr %s217, 32
          %s219 = scalar_lea.vmem [#allocation2], %s218
          %s220 = smul.u32 2, %s19
          %s222 = ssub.s32 512, 512
          %223 = vsyncadd %s216, %s222
          %s224 = smul.addr %s220, 2
          %s225 = smul.addr %s224, 128
          %s226 = scalar_lea.hbm %s0, %s225
          %s227 = sshll.u32 %s219, 4
          %s228 = int_to_ptr.vmem [resolvable:$true] %s227
          %233 = dma.hbm_to_vmem [thread:$0]  %s226, 512, %s228, %s216, 128, 128, 8
        $region36: #{tpu_custom_call.1} parent=31 // pred_fallthru
          _
      $region32: #{tpu_custom_call.1} parent=5 // pred_fallthru
        _
      %p234 = scmp.le.s32.totalorder 1, %s19
      %p235 = scmp.lt.s32.totalorder %s19, 5
      %p236 = pnand %p234, %p235
      %p237 = pneg %p236
      // Predicated region
      $region37: #{tpu_custom_call.1} parent=5 // pred_check
        _
      $region38: #{tpu_custom_call.1} parent=5 // pred_check_branch
        %239 = sbr.rel (%p236) target = $region40
      $region39: #{tpu_custom_call.1} parent=5 // pred_region
        %s240 = ssub.s32 %s19, 1
        %s241 = sand.u32 %s32, 1
        %s242 = scalar_lea.sflag [#allocation3], %s241
        %s243 = sand.u32 %s32, 1
        %s244 = smul.addr %s243, 32
        %s245 = scalar_lea.vmem [#allocation2], %s244
        // Predicated region
        $region41: #{tpu_custom_call.1} parent=39 // pred_check
          %p246 = pneg %p45
        $region42: #{tpu_custom_call.1} parent=39 // pred_check_branch
          %248 = sbr.rel (%p246) target = $region44
        $region43: #{tpu_custom_call.1} parent=39 // pred_region
          %249 = dma.done %s242, 512
        $region44: #{tpu_custom_call.1} parent=39 // pred_fallthru
          _
        %s250 = sand.u32 %s32, 1
        %s251 = scalar_lea.sflag [#allocation3], %s250
        %s252 = sand.u32 %s32, 1
        %s253 = smul.addr %s252, 32
        %s254 = scalar_lea.vmem [#allocation2], %s253
        %p255 = pneg %p45
        %p256 = pneg %p42
        %p257 = pneg %p66
        %p258 = pneg %p63
        %p259 = pneg %p87
        %p260 = pneg %p84
        %p261 = pneg %p108
        %p262 = pneg %p105
        %p263 = pneg %p129
        %p264 = pneg %p126
        %p265 = pneg %p155
        %p266 = pneg %p152
        %s267 = sand.u32 %s142, 1
        %s268 = scalar_lea.sflag [#allocation4], %s267
        %s269 = sand.u32 %s142, 1
        %s270 = smul.addr %s269, 16
        %s271 = scalar_lea.vmem [#allocation5], %s270
        %p272 = pneg %p181
        %p273 = pneg %p178
        %s274 = smul.u32 2, %s24
        %p275 = scmp.lt.s32.totalorder %s274, 7
        %s276 = scalar_select %p275, %s274, 7
        %s277 = smul.addr %s276, 4
        %s278 = scalar_lea.vmem %s6, %s277
        %s279 = smul.u32 2, %s24
        %s280 = smul.u32 2, %s24
        %s281 = smul.u32 2, %s24
        %p282 = scmp.lt.s32.totalorder %s281, 7
        %s283 = scalar_select %p282, %s281, 7
        %s284 = smul.addr %s283, 4
        %s285 = scalar_lea.vmem %s6, %s284
        %s286 = smul.u32 2, %s24
        %v287 = vld [vmem:[%s1] sm:$0xff]
        %v288 = vld [vmem:[%s2] sm:$0xff]
        %v289 = vld [vmem:[%s2 + $0x8] sm:$0xff]
        %v290 = vld [vmem:[%s245] sm:$0xff]
        %v291 = vld [vmem:[%s245 + $0x8] sm:$0xff]
        %v292 = vld [vmem:[%s245 + $0x10] sm:$0xff]
        %v293 = vld [vmem:[%s245 + $0x18] sm:$0xff]
        %vm294 = vcmask 130048
        %v296 = vsel %vm294, %v290, 0
        %v299 = vsel %vm294, %v291, 0
        %v302 = vsel %vm294, %v292, 0
        %v305 = vsel %vm294, %v293, 0
        %307 = vmatprep.subr.mxu0 0.0
        %308 = vmatpush1.msra.mxu0 %v288
        %309 = vmatprep.subr.mxu0 0.0
        %310 = vmatpush1.msra.mxu0 %v289
        %311 = vmatprep.subr.mxu0 0.0
        %312 = vmatpush1.msra.mxu0 0.0
        %313 = vmatprep.subr.mxu0 0.0
        %314 = vmatpush1.msra.mxu0 0.0
        %315 = vmatprep.subr.mxu0 0.0
        %316 = vmatpush1.msra.mxu0 0.0
        %317 = vmatprep.subr.mxu0 0.0
        %318 = vmatpush1.msra.mxu0 0.0
        %319 = vmatprep.subr.mxu0 0.0
        %320 = vmatpush1.msra.mxu0 0.0
        %321 = vmatprep.subr.mxu0 0.0
        %322 = vmatpush1.msra.mxu0 0.0
        %323 = vmatprep.subr.mxu0 0.0
        %324 = vmatpush1.msra.mxu0 0.0
        %325 = vmatprep.subr.mxu0 0.0
        %326 = vmatpush1.msra.mxu0 0.0
        %327 = vmatprep.subr.mxu0 0.0
        %328 = vmatpush1.msra.mxu0 0.0
        %329 = vmatprep.subr.mxu0 0.0
        %330 = vmatpush1.msra.mxu0 0.0
        %331 = vmatprep.subr.mxu0 0.0
        %332 = vmatpush1.msra.mxu0 0.0
        %333 = vmatprep.subr.mxu0 0.0
        %334 = vmatpush1.msra.mxu0 0.0
        %335 = vmatprep.subr.mxu0 0.0
        %336 = vmatpush1.msra.mxu0 0.0
        %337 = vmatprep.subr.mxu0 0.0
        %338 = vmatpush1.msra.mxu0 0.0
        %339 = vmatprep.subr.mxu0 0.0
        %340 = vmatpush1.msra.mxu0 0.0
        %341 = vmatprep.subr.mxu0 0.0
        %342 = vmatpush1.msra.mxu0 0.0
        %343 = vmatprep.subr.mxu0 0.0
        %344 = vmatpush1.msra.mxu0 0.0
        %345 = vmatprep.subr.mxu0 0.0
        %346 = vmatpush1.msra.mxu0 0.0
        %347 = vmatprep.subr.mxu0 0.0
        %348 = vmatpush1.msra.mxu0 0.0
        %349 = vmatprep.subr.mxu0 0.0
        %350 = vmatpush1.msra.mxu0 0.0
        %351 = vmatprep.subr.mxu0 0.0
        %352 = vmatpush1.msra.mxu0 0.0
        %353 = vmatprep.subr.mxu0 0.0
        %354 = vmatpush1.msra.mxu0 0.0
        %355 = vmatprep.subr.mxu0 0.0
        %356 = vmatpush1.msra.mxu0 0.0
        %357 = vmatprep.subr.mxu0 0.0
        %358 = vmatpush1.msra.mxu0 0.0
        %359 = vmatprep.subr.mxu0 0.0
        %360 = vmatpush1.msra.mxu0 0.0
        %361 = vmatprep.subr.mxu0 0.0
        %362 = vmatpush1.msra.mxu0 0.0
        %363 = vmatprep.subr.mxu0 0.0
        %364 = vmatpush1.msra.mxu0 0.0
        %365 = vmatprep.subr.mxu0 0.0
        %366 = vmatpush1.msra.mxu0 0.0
        %367 = vmatprep.subr.mxu0 0.0
        %368 = vmatpush1.msra.mxu0 0.0
        %369 = vmatprep.subr.mxu0 0.0
        %370 = vmatpush1.msra.mxu0 0.0
        %371 = vmatprep.mubr.f32.mxu0 0.0
        %372 = vmatmul.mubr.f32.gmra.mrb[0].mxu0 %v296
        %v373 = vpop.f32.mrb[0].mxu0
        %v374 = vadd.f32 0.0, %v373
        %v375 = vpop.f32.mrb[0].mxu0
        %376 = vmatprep.mubr.f32.mxu0 0.0
        %377 = vmatmul.mubr.f32.gmra.mrb[0].mxu0 %v299
        %v378 = vpop.f32.mrb[0].mxu0
        %v379 = vadd.f32 0.0, %v378
        %v380 = vpop.f32.mrb[0].mxu0
        %381 = vmatprep.mubr.f32.mxu0 0.0
        %382 = vmatmul.mubr.f32.gmra.mrb[0].mxu0 %v302
        %v383 = vpop.f32.mrb[0].mxu0
        %v384 = vadd.f32 0.0, %v383
        %v385 = vpop.f32.mrb[0].mxu0
        %386 = vmatprep.mubr.f32.mxu0 0.0
        %387 = vmatmul.mubr.f32.gmra.mrb[0].mxu0 %v305
        %v388 = vpop.f32.mrb[0].mxu0
        %v389 = vadd.f32 0.0, %v388
        %v390 = vpop.f32.mrb[0].mxu0
        %391 = vdwg.mxu0
        %v393 = vsel %vm294, %v287, 0
        %395 = vmatprep.subr.mxu0 0.0
        %396 = vmatpush1.msra.mxu0 %v374
        %397 = vmatprep.subr.mxu0 0.0
        %398 = vmatpush1.msra.mxu0 %v379
        %399 = vmatprep.subr.mxu0 0.0
        %400 = vmatpush1.msra.mxu0 0.0
        %401 = vmatprep.subr.mxu0 0.0
        %402 = vmatpush1.msra.mxu0 0.0
        %403 = vmatprep.subr.mxu0 0.0
        %404 = vmatpush1.msra.mxu0 0.0
        %405 = vmatprep.subr.mxu0 0.0
        %406 = vmatpush1.msra.mxu0 0.0
        %407 = vmatprep.subr.mxu0 0.0
        %408 = vmatpush1.msra.mxu0 0.0
        %409 = vmatprep.subr.mxu0 0.0
        %410 = vmatpush1.msra.mxu0 0.0
        %411 = vmatprep.subr.mxu0 0.0
        %412 = vmatpush1.msra.mxu0 0.0
        %413 = vmatprep.subr.mxu0 0.0
        %414 = vmatpush1.msra.mxu0 0.0
        %415 = vmatprep.subr.mxu0 0.0
        %416 = vmatpush1.msra.mxu0 0.0
        %417 = vmatprep.subr.mxu0 0.0
        %418 = vmatpush1.msra.mxu0 0.0
        %419 = vmatprep.subr.mxu0 0.0
        %420 = vmatpush1.msra.mxu0 0.0
        %421 = vmatprep.subr.mxu0 0.0
        %422 = vmatpush1.msra.mxu0 0.0
        %423 = vmatprep.subr.mxu0 0.0
        %424 = vmatpush1.msra.mxu0 0.0
        %425 = vmatprep.subr.mxu0 0.0
        %426 = vmatpush1.msra.mxu0 0.0
        %427 = vmatprep.subr.mxu0 0.0
        %428 = vmatpush1.msra.mxu0 0.0
        %429 = vmatprep.subr.mxu0 0.0
        %430 = vmatpush1.msra.mxu0 0.0
        %431 = vmatprep.subr.mxu0 0.0
        %432 = vmatpush1.msra.mxu0 0.0
        %433 = vmatprep.subr.mxu0 0.0
        %434 = vmatpush1.msra.mxu0 0.0
        %435 = vmatprep.subr.mxu0 0.0
        %436 = vmatpush1.msra.mxu0 0.0
        %437 = vmatprep.subr.mxu0 0.0
        %438 = vmatpush1.msra.mxu0 0.0
        %439 = vmatprep.subr.mxu0 0.0
        %440 = vmatpush1.msra.mxu0 0.0
        %441 = vmatprep.subr.mxu0 0.0
        %442 = vmatpush1.msra.mxu0 0.0
        %443 = vmatprep.subr.mxu0 0.0
        %444 = vmatpush1.msra.mxu0 0.0
        %445 = vmatprep.subr.mxu0 0.0
        %446 = vmatpush1.msra.mxu0 0.0
        %447 = vmatprep.subr.mxu0 0.0
        %448 = vmatpush1.msra.mxu0 0.0
        %449 = vmatprep.subr.mxu0 0.0
        %450 = vmatpush1.msra.mxu0 0.0
        %451 = vmatprep.subr.mxu0 0.0
        %452 = vmatpush1.msra.mxu0 0.0
        %453 = vmatprep.subr.mxu0 0.0
        %454 = vmatpush1.msra.mxu0 0.0
        %455 = vmatprep.subr.mxu0 0.0
        %456 = vmatpush1.msra.mxu0 0.0
        %457 = vmatprep.subr.mxu0 0.0
        %458 = vmatpush1.msra.mxu0 0.0
        %459 = vmatprep.mubr.f32.mxu0 0.0
        %460 = vmatmul.mubr.f32.gmra.mrb[0].mxu0 %v393
        %v461 = vpop.f32.mrb[0].mxu0
        %v462 = vadd.f32 0.0, %v461
        %v463 = vpop.f32.mrb[0].mxu0
        %464 = vdwg.mxu0
        %465 = vmatprep.subr.mxu0 0.0
        %466 = vmatpush1.msra.mxu0 %v384
        %467 = vmatprep.subr.mxu0 0.0
        %468 = vmatpush1.msra.mxu0 %v389
        %469 = vmatprep.subr.mxu0 0.0
        %470 = vmatpush1.msra.mxu0 0.0
        %471 = vmatprep.subr.mxu0 0.0
        %472 = vmatpush1.msra.mxu0 0.0
        %473 = vmatprep.subr.mxu0 0.0
        %474 = vmatpush1.msra.mxu0 0.0
        %475 = vmatprep.subr.mxu0 0.0
        %476 = vmatpush1.msra.mxu0 0.0
        %477 = vmatprep.subr.mxu0 0.0
        %478 = vmatpush1.msra.mxu0 0.0
        %479 = vmatprep.subr.mxu0 0.0
        %480 = vmatpush1.msra.mxu0 0.0
        %481 = vmatprep.subr.mxu0 0.0
        %482 = vmatpush1.msra.mxu0 0.0
        %483 = vmatprep.subr.mxu0 0.0
        %484 = vmatpush1.msra.mxu0 0.0
        %485 = vmatprep.subr.mxu0 0.0
        %486 = vmatpush1.msra.mxu0 0.0
        %487 = vmatprep.subr.mxu0 0.0
        %488 = vmatpush1.msra.mxu0 0.0
        %489 = vmatprep.subr.mxu0 0.0
        %490 = vmatpush1.msra.mxu0 0.0
        %491 = vmatprep.subr.mxu0 0.0
        %492 = vmatpush1.msra.mxu0 0.0
        %493 = vmatprep.subr.mxu0 0.0
        %494 = vmatpush1.msra.mxu0 0.0
        %495 = vmatprep.subr.mxu0 0.0
        %496 = vmatpush1.msra.mxu0 0.0
        %497 = vmatprep.subr.mxu0 0.0
        %498 = vmatpush1.msra.mxu0 0.0
        %499 = vmatprep.subr.mxu0 0.0
        %500 = vmatpush1.msra.mxu0 0.0
        %501 = vmatprep.subr.mxu0 0.0
        %502 = vmatpush1.msra.mxu0 0.0
        %503 = vmatprep.subr.mxu0 0.0
        %504 = vmatpush1.msra.mxu0 0.0
        %505 = vmatprep.subr.mxu0 0.0
        %506 = vmatpush1.msra.mxu0 0.0
        %507 = vmatprep.subr.mxu0 0.0
        %508 = vmatpush1.msra.mxu0 0.0
        %509 = vmatprep.subr.mxu0 0.0
        %510 = vmatpush1.msra.mxu0 0.0
        %511 = vmatprep.subr.mxu0 0.0
        %512 = vmatpush1.msra.mxu0 0.0
        %513 = vmatprep.subr.mxu0 0.0
        %514 = vmatpush1.msra.mxu0 0.0
        %515 = vmatprep.subr.mxu0 0.0
        %516 = vmatpush1.msra.mxu0 0.0
        %517 = vmatprep.subr.mxu0 0.0
        %518 = vmatpush1.msra.mxu0 0.0
        %519 = vmatprep.subr.mxu0 0.0
        %520 = vmatpush1.msra.mxu0 0.0
        %521 = vmatprep.subr.mxu0 0.0
        %522 = vmatpush1.msra.mxu0 0.0
        %523 = vmatprep.subr.mxu0 0.0
        %524 = vmatpush1.msra.mxu0 0.0
        %525 = vmatprep.subr.mxu0 0.0
        %526 = vmatpush1.msra.mxu0 0.0
        %527 = vmatprep.subr.mxu0 0.0
        %528 = vmatpush1.msra.mxu0 0.0
        %529 = vmatprep.mubr.f32.mxu0 0.0
        %530 = vmatmul.mubr.f32.gmra.mrb[0].mxu0 %v393
        %v531 = vpop.f32.mrb[0].mxu0
        %v532 = vadd.f32 0.0, %v531
        %v533 = vpop.f32.mrb[0].mxu0
        %534 = vdwg.mxu0
        %vm535 = vcmask 64512
        %536 = vst.msk [vmem:[%s271] sm:$0xff] %vm535, %v462
        %537 = vst.msk [vmem:[%s271 + $0x8] sm:$0xff] %vm535, %v532
        %v538 = vld [vmem:[%s3] sm:$0xf]
        %v539 = vld [vmem:[%s4] sm:$0xff]
        %v540 = vld [vmem:[%s271] sm:$0xff]
        %v541 = vld [vmem:[%s271 + $0x8] sm:$0xff]
        %v543 = vsel %vm535, %v540, 0
        %v546 = vsel %vm535, %v541, 0
        %548 = vmatprep.subr.mxu0 0.0
        %549 = vmatpush1.msra.mxu0 %v539
        %550 = vmatprep.subr.mxu0 0.0
        %551 = vmatpush1.msra.mxu0 0.0
        %552 = vmatprep.subr.mxu0 0.0
        %553 = vmatpush1.msra.mxu0 0.0
        %554 = vmatprep.subr.mxu0 0.0
        %555 = vmatpush1.msra.mxu0 0.0
        %556 = vmatprep.subr.mxu0 0.0
        %557 = vmatpush1.msra.mxu0 0.0
        %558 = vmatprep.subr.mxu0 0.0
        %559 = vmatpush1.msra.mxu0 0.0
        %560 = vmatprep.subr.mxu0 0.0
        %561 = vmatpush1.msra.mxu0 0.0
        %562 = vmatprep.subr.mxu0 0.0
        %563 = vmatpush1.msra.mxu0 0.0
        %564 = vmatprep.subr.mxu0 0.0
        %565 = vmatpush1.msra.mxu0 0.0
        %566 = vmatprep.subr.mxu0 0.0
        %567 = vmatpush1.msra.mxu0 0.0
        %568 = vmatprep.subr.mxu0 0.0
        %569 = vmatpush1.msra.mxu0 0.0
        %570 = vmatprep.subr.mxu0 0.0
        %571 = vmatpush1.msra.mxu0 0.0
        %572 = vmatprep.subr.mxu0 0.0
        %573 = vmatpush1.msra.mxu0 0.0
        %574 = vmatprep.subr.mxu0 0.0
        %575 = vmatpush1.msra.mxu0 0.0
        %576 = vmatprep.subr.mxu0 0.0
        %577 = vmatpush1.msra.mxu0 0.0
        %578 = vmatprep.subr.mxu0 0.0
        %579 = vmatpush1.msra.mxu0 0.0
        %580 = vmatprep.subr.mxu0 0.0
        %581 = vmatpush1.msra.mxu0 0.0
        %582 = vmatprep.subr.mxu0 0.0
        %583 = vmatpush1.msra.mxu0 0.0
        %584 = vmatprep.subr.mxu0 0.0
        %585 = vmatpush1.msra.mxu0 0.0
        %586 = vmatprep.subr.mxu0 0.0
        %587 = vmatpush1.msra.mxu0 0.0
        %588 = vmatprep.subr.mxu0 0.0
        %589 = vmatpush1.msra.mxu0 0.0
        %590 = vmatprep.subr.mxu0 0.0
        %591 = vmatpush1.msra.mxu0 0.0
        %592 = vmatprep.subr.mxu0 0.0
        %593 = vmatpush1.msra.mxu0 0.0
        %594 = vmatprep.subr.mxu0 0.0
        %595 = vmatpush1.msra.mxu0 0.0
        %596 = vmatprep.subr.mxu0 0.0
        %597 = vmatpush1.msra.mxu0 0.0
        %598 = vmatprep.subr.mxu0 0.0
        %599 = vmatpush1.msra.mxu0 0.0
        %600 = vmatprep.subr.mxu0 0.0
        %601 = vmatpush1.msra.mxu0 0.0
        %602 = vmatprep.subr.mxu0 0.0
        %603 = vmatpush1.msra.mxu0 0.0
        %604 = vmatprep.subr.mxu0 0.0
        %605 = vmatpush1.msra.mxu0 0.0
        %606 = vmatprep.subr.mxu0 0.0
        %607 = vmatpush1.msra.mxu0 0.0
        %608 = vmatprep.subr.mxu0 0.0
        %609 = vmatpush1.msra.mxu0 0.0
        %610 = vmatprep.subr.mxu0 0.0
        %611 = vmatpush1.msra.mxu0 0.0
        %612 = vmatprep.mubr.f32.mxu0 0.0
        %613 = vmatmul.mubr.f32.gmra.mrb[0].mxu0 %v543
        %v614 = vpop.f32.mrb[0].mxu0
        %v615 = vadd.f32 0.0, %v614
        %v616 = vpop.f32.mrb[0].mxu0
        %617 = vmatprep.mubr.f32.mxu0 0.0
        %618 = vmatmul.mubr.f32.gmra.mrb[0].mxu0 %v546
        %v619 = vpop.f32.mrb[0].mxu0
        %v620 = vadd.f32 0.0, %v619
        %v621 = vpop.f32.mrb[0].mxu0
        %622 = vdwg.mxu0
        %v624 = vsel %vm535, %v538, 0
        %626 = vmatprep.subr.mxu0 0.0
        %627 = vmatpush1.msra.mxu0 %v615
        %628 = vmatprep.subr.mxu0 0.0
        %629 = vmatpush1.msra.mxu0 0.0
        %630 = vmatprep.subr.mxu0 0.0
        %631 = vmatpush1.msra.mxu0 0.0
        %632 = vmatprep.subr.mxu0 0.0
        %633 = vmatpush1.msra.mxu0 0.0
        %634 = vmatprep.subr.mxu0 0.0
        %635 = vmatpush1.msra.mxu0 0.0
        %636 = vmatprep.subr.mxu0 0.0
        %637 = vmatpush1.msra.mxu0 0.0
        %638 = vmatprep.subr.mxu0 0.0
        %639 = vmatpush1.msra.mxu0 0.0
        %640 = vmatprep.subr.mxu0 0.0
        %641 = vmatpush1.msra.mxu0 0.0
        %642 = vmatprep.subr.mxu0 0.0
        %643 = vmatpush1.msra.mxu0 0.0
        %644 = vmatprep.subr.mxu0 0.0
        %645 = vmatpush1.msra.mxu0 0.0
        %646 = vmatprep.subr.mxu0 0.0
        %647 = vmatpush1.msra.mxu0 0.0
        %648 = vmatprep.subr.mxu0 0.0
        %649 = vmatpush1.msra.mxu0 0.0
        %650 = vmatprep.subr.mxu0 0.0
        %651 = vmatpush1.msra.mxu0 0.0
        %652 = vmatprep.subr.mxu0 0.0
        %653 = vmatpush1.msra.mxu0 0.0
        %654 = vmatprep.subr.mxu0 0.0
        %655 = vmatpush1.msra.mxu0 0.0
        %656 = vmatprep.subr.mxu0 0.0
        %657 = vmatpush1.msra.mxu0 0.0
        %658 = vmatprep.subr.mxu0 0.0
        %659 = vmatpush1.msra.mxu0 0.0
        %660 = vmatprep.subr.mxu0 0.0
        %661 = vmatpush1.msra.mxu0 0.0
        %662 = vmatprep.subr.mxu0 0.0
        %663 = vmatpush1.msra.mxu0 0.0
        %664 = vmatprep.subr.mxu0 0.0
        %665 = vmatpush1.msra.mxu0 0.0
        %666 = vmatprep.subr.mxu0 0.0
        %667 = vmatpush1.msra.mxu0 0.0
        %668 = vmatprep.subr.mxu0 0.0
        %669 = vmatpush1.msra.mxu0 0.0
        %670 = vmatprep.subr.mxu0 0.0
        %671 = vmatpush1.msra.mxu0 0.0
        %672 = vmatprep.subr.mxu0 0.0
        %673 = vmatpush1.msra.mxu0 0.0
        %674 = vmatprep.subr.mxu0 0.0
        %675 = vmatpush1.msra.mxu0 0.0
        %676 = vmatprep.subr.mxu0 0.0
        %677 = vmatpush1.msra.mxu0 0.0
        %678 = vmatprep.subr.mxu0 0.0
        %679 = vmatpush1.msra.mxu0 0.0
        %680 = vmatprep.subr.mxu0 0.0
        %681 = vmatpush1.msra.mxu0 0.0
        %682 = vmatprep.subr.mxu0 0.0
        %683 = vmatpush1.msra.mxu0 0.0
        %684 = vmatprep.subr.mxu0 0.0
        %685 = vmatpush1.msra.mxu0 0.0
        %686 = vmatprep.subr.mxu0 0.0
        %687 = vmatpush1.msra.mxu0 0.0
        %688 = vmatprep.subr.mxu0 0.0
        %689 = vmatpush1.msra.mxu0 0.0
        %690 = vmatprep.mubr.f32.mxu0 0.0
        %691 = vmatmul.mubr.f32.gmra.mrb[0].mxu0 %v624
        %v692 = vpop.f32.mrb[0].mxu0
        %v693 = vadd.f32 0.0, %v692
        %v694 = vpop.f32.mrb[0].mxu0
        %695 = vdwg.mxu0
        %696 = vmatprep.subr.mxu0 0.0
        %697 = vmatpush1.msra.mxu0 %v620
        %698 = vmatprep.subr.mxu0 0.0
        %699 = vmatpush1.msra.mxu0 0.0
        %700 = vmatprep.subr.mxu0 0.0
        %701 = vmatpush1.msra.mxu0 0.0
        %702 = vmatprep.subr.mxu0 0.0
        %703 = vmatpush1.msra.mxu0 0.0
        %704 = vmatprep.subr.mxu0 0.0
        %705 = vmatpush1.msra.mxu0 0.0
        %706 = vmatprep.subr.mxu0 0.0
        %707 = vmatpush1.msra.mxu0 0.0
        %708 = vmatprep.subr.mxu0 0.0
        %709 = vmatpush1.msra.mxu0 0.0
        %710 = vmatprep.subr.mxu0 0.0
        %711 = vmatpush1.msra.mxu0 0.0
        %712 = vmatprep.subr.mxu0 0.0
        %713 = vmatpush1.msra.mxu0 0.0
        %714 = vmatprep.subr.mxu0 0.0
        %715 = vmatpush1.msra.mxu0 0.0
        %716 = vmatprep.subr.mxu0 0.0
        %717 = vmatpush1.msra.mxu0 0.0
        %718 = vmatprep.subr.mxu0 0.0
        %719 = vmatpush1.msra.mxu0 0.0
        %720 = vmatprep.subr.mxu0 0.0
        %721 = vmatpush1.msra.mxu0 0.0
        %722 = vmatprep.subr.mxu0 0.0
        %723 = vmatpush1.msra.mxu0 0.0
        %724 = vmatprep.subr.mxu0 0.0
        %725 = vmatpush1.msra.mxu0 0.0
        %726 = vmatprep.subr.mxu0 0.0
        %727 = vmatpush1.msra.mxu0 0.0
        %728 = vmatprep.subr.mxu0 0.0
        %729 = vmatpush1.msra.mxu0 0.0
        %730 = vmatprep.subr.mxu0 0.0
        %731 = vmatpush1.msra.mxu0 0.0
        %732 = vmatprep.subr.mxu0 0.0
        %733 = vmatpush1.msra.mxu0 0.0
        %734 = vmatprep.subr.mxu0 0.0
        %735 = vmatpush1.msra.mxu0 0.0
        %736 = vmatprep.subr.mxu0 0.0
        %737 = vmatpush1.msra.mxu0 0.0
        %738 = vmatprep.subr.mxu0 0.0
        %739 = vmatpush1.msra.mxu0 0.0
        %740 = vmatprep.subr.mxu0 0.0
        %741 = vmatpush1.msra.mxu0 0.0
        %742 = vmatprep.subr.mxu0 0.0
        %743 = vmatpush1.msra.mxu0 0.0
        %744 = vmatprep.subr.mxu0 0.0
        %745 = vmatpush1.msra.mxu0 0.0
        %746 = vmatprep.subr.mxu0 0.0
        %747 = vmatpush1.msra.mxu0 0.0
        %748 = vmatprep.subr.mxu0 0.0
        %749 = vmatpush1.msra.mxu0 0.0
        %750 = vmatprep.subr.mxu0 0.0
        %751 = vmatpush1.msra.mxu0 0.0
        %752 = vmatprep.subr.mxu0 0.0
        %753 = vmatpush1.msra.mxu0 0.0
        %754 = vmatprep.subr.mxu0 0.0
        %755 = vmatpush1.msra.mxu0 0.0
        %756 = vmatprep.subr.mxu0 0.0
        %757 = vmatpush1.msra.mxu0 0.0
        %758 = vmatprep.subr.mxu0 0.0
        %759 = vmatpush1.msra.mxu0 0.0
        %760 = vmatprep.mubr.f32.mxu0 0.0
        %761 = vmatmul.mubr.f32.gmra.mrb[0].mxu0 %v624
        %v762 = vpop.f32.mrb[0].mxu0
        %v763 = vadd.f32 0.0, %v762
        %v764 = vpop.f32.mrb[0].mxu0
        %765 = vdwg.mxu0
        %vm766 = vcmask 27648
        %767 = vst.msk [vmem:[%s285] sm:$0xf] %vm766, %v693
        %768 = vst.msk [vmem:[%s285 + $0x4] sm:$0xf] %vm766, %v763
        %s769 = sand.u32 %s142, 1
        %s770 = scalar_lea.sflag [#allocation4], %s769
        %s771 = sand.u32 %s142, 1
        %s772 = smul.addr %s771, 16
        %s773 = scalar_lea.vmem [#allocation5], %s772
        %s774 = smul.u32 2, %s24
        %p775 = scmp.lt.s32.totalorder %s774, 7
        %s776 = scalar_select %p775, %s774, 7
        %s777 = smul.addr %s776, 4
        %s778 = scalar_lea.vmem %s6, %s777
        // Predicated region
        $region45: #{tpu_custom_call.1} parent=39 // pred_check
          %p779 = pneg %p152
        $region46: #{tpu_custom_call.1} parent=39 // pred_check_branch
          %781 = sbr.rel (%p779) target = $region48
        $region47: #{tpu_custom_call.1} parent=39 // pred_region
          %s782 = smul.u32 2, %s24
          %s784 = ssub.s32 256, 256
          %785 = vsyncadd %s770, %s784
          %s786 = smul.addr %s782, 128
          %s787 = scalar_lea.hbm %s5, %s786
          %s788 = sshll.u32 %s773, 4
          %s789 = int_to_ptr.vmem [resolvable:$true] %s788
          %794 = dma.vmem_to_hbm [thread:$0]  %s789, 256, %s787, %s770, 128, 128, 8
        $region48: #{tpu_custom_call.1} parent=39 // pred_fallthru
          _
        // Predicated region
        $region49: #{tpu_custom_call.1} parent=39 // pred_check
          %p795 = pneg %p178
        $region50: #{tpu_custom_call.1} parent=39 // pred_check_branch
          %797 = sbr.rel (%p795) target = $region52
        $region51: #{tpu_custom_call.1} parent=39 // pred_region
          %s798 = smul.u32 2, %s24
        $region52: #{tpu_custom_call.1} parent=39 // pred_fallthru
          _
      $region40: #{tpu_custom_call.1} parent=5 // pred_fallthru
        _
      %p799 = scmp.le.s32.totalorder 2, %s19
      // Predicated region
      $region53: #{tpu_custom_call.1} parent=5 // pred_check
        %p800 = pneg %p799
      $region54: #{tpu_custom_call.1} parent=5 // pred_check_branch
        %802 = sbr.rel (%p800) target = $region56
      $region55: #{tpu_custom_call.1} parent=5 // pred_region
        %s803 = ssub.s32 %s19, 2
        // Predicated region
        $region57: #{tpu_custom_call.1} parent=55 // pred_check
          %p804 = pneg %p158
        $region58: #{tpu_custom_call.1} parent=55 // pred_check_branch
          %806 = sbr.rel (%p804) target = $region60
        $region59: #{tpu_custom_call.1} parent=55 // pred_region
          %s807 = sand.u32 %s143, 1
          %s808 = scalar_lea.sflag [#allocation4], %s807
          %s809 = sand.u32 %s143, 1
          %s810 = smul.addr %s809, 16
          %s811 = scalar_lea.vmem [#allocation5], %s810
          %812 = dma.done %s808, 256
        $region60: #{tpu_custom_call.1} parent=55 // pred_fallthru
          _
        // Predicated region
        $region61: #{tpu_custom_call.1} parent=55 // pred_check
          %p813 = pneg %p184
        $region62: #{tpu_custom_call.1} parent=55 // pred_check_branch
          %815 = sbr.rel (%p813) target = $region64
        $region63: #{tpu_custom_call.1} parent=55 // pred_region
          %s816 = smul.u32 2, %s25
          %p817 = scmp.lt.s32.totalorder %s816, 7
          %s818 = scalar_select %p817, %s816, 7
          %s819 = smul.addr %s818, 4
          %s820 = scalar_lea.vmem %s6, %s819
        $region64: #{tpu_custom_call.1} parent=55 // pred_fallthru
          _
      $region56: #{tpu_custom_call.1} parent=5 // pred_fallthru
        _
    $region6: #{tpu_custom_call.1} parent=1 // loop_footer
      %s23 = sadd.s32 1, %s19
    $region7: #{tpu_custom_call.1} parent=1 // loop_footer_branch
      %18 = sbr.rel target = $region3
    $region8: #{tpu_custom_call.1} parent=1 // loop_exit
      _
    %821 = vsyncpa [#allocation3], 1
    %s822 = scalar_lea.sflag [#allocation3], 1
    %823 = vsyncpa %s822, 1
    %824 = vsyncpa [#allocation4], 1
    %s825 = scalar_lea.sflag [#allocation4], 1
    %826 = vsyncpa %s825, 1

</llo_original>
